<compile_context>
chip_gen: v5e
topology: v5e:2x2
jax: 0.10.0
libtpu: 0.0.40
codegen_flags: <defaults>
</compile_context>

<pallas_src>
import functools
from math import sqrt

import jax
import jax.numpy as jnp
from jax.experimental import pallas as pl
from jax.experimental.pallas import tpu as pltpu


def _maxout2d_kernel(x_ref, w_ref, b_ref, g_ref, beta_ref, o_ref,
                     sum_ref, sumsq_ref, *, pool, hw_tile, inv_hw, eps):
    # x_ref:    (1, Cin, hw_tile)       current HW tile of one sample
    # w_ref:    (pool, Cout, Cin)       resident weights (one slab per pool member)
    # b_ref:    (pool, Cout, 1)         f32 biases
    # g_ref:    (Cout, 1)  beta_ref: (Cout, 1)   f32 affine params
    # o_ref:    (1, Cout, HW)           resident output block for the sample
    # sum_ref / sumsq_ref: (Cout, 1)    f32 instance-norm accumulators
    t = pl.program_id(1)
    t_last = pl.num_programs(1) - 1

    @pl.when(t == 0)
    def _init():
        sum_ref[...] = jnp.zeros_like(sum_ref)
        sumsq_ref[...] = jnp.zeros_like(sumsq_ref)

    x = x_ref[0]                                                     # (Cin, hw_tile)

    # pool separate matmuls folded through a max accumulator (no pool*Cout intermediate)
    m = jnp.dot(w_ref[0], x, preferred_element_type=jnp.float32) + b_ref[0]
    for p in range(1, pool):
        mp = jnp.dot(w_ref[p], x, preferred_element_type=jnp.float32) + b_ref[p]
        m = jnp.maximum(m, mp)                                       # (Cout, hw_tile) f32

    # one-pass instance-norm statistics
    sum_ref[...] += jnp.sum(m, axis=1, keepdims=True)
    sumsq_ref[...] += jnp.sum(m * m, axis=1, keepdims=True)

    # stash the (un-normalized) maxout tile in the resident output block
    off = pl.multiple_of(t * hw_tile, hw_tile)
    o_ref[0, :, pl.ds(off, hw_tile)] = m.astype(o_ref.dtype)

    @pl.when(t == t_last)
    def _finalize():
        mean = sum_ref[...] * inv_hw                                 # (Cout, 1)
        var = sumsq_ref[...] * inv_hw - mean * mean                  # biased variance
        inv_std = jax.lax.rsqrt(var + eps)
        scale = g_ref[...] * inv_std
        shift = beta_ref[...] - mean * scale
        vals = o_ref[0].astype(jnp.float32)                          # (Cout, HW)
        o_ref[0] = (vals * scale + shift).astype(o_ref.dtype)


def _pick_hw_tile(hw, cin, itemsize, target_bytes=2 << 20):
    """Largest multiple-of-128 divisor of HW whose x tile (Cin*tile) fits ~target_bytes."""
    if hw % 128 != 0:
        return hw                      # fall back: single full-extent block
    best = None
    for cand in range(128, hw + 1, 128):
        if hw % cand == 0 and cin * cand * itemsize <= target_bytes:
            best = cand
    return best if best is not None else 128


def maxout2d_pallas(x_nchw, conv_w, conv_b, gamma, beta, *, pool, eps=1e-5, hw_tile=None):
    """x_nchw: (N, Cin, H, W); conv_w: (Cout*pool, Cin, 1, 1); conv_b: (Cout*pool,)."""
    N, Cin, H, W = x_nchw.shape
    Cout = conv_w.shape[0] // pool
    HW = H * W
    dt = x_nchw.dtype
    itemsize = jnp.dtype(dt).itemsize

    # (N, Cin, HW) is a free reshape of NCHW (no transpose passes through HBM).
    x_ncl = x_nchw.reshape(N, Cin, HW)

    # Conv channel c = j*pool + p  ->  weight slab [p, j, i]; maxout groups are the p axis.
    w_pjc = jnp.transpose(conv_w.reshape(Cout, pool, Cin), (1, 0, 2)).astype(dt)  # (pool,Cout,Cin)
    b_pj = jnp.transpose(conv_b.reshape(Cout, pool), (1, 0)).reshape(pool, Cout, 1)
    b_pj = b_pj.astype(jnp.float32)
    g2 = gamma.reshape(Cout, 1).astype(jnp.float32)
    be2 = beta.reshape(Cout, 1).astype(jnp.float32)

    if hw_tile is None:
        hw_tile = _pick_hw_tile(HW, Cin, itemsize)
    assert HW % hw_tile == 0 and (hw_tile % 128 == 0 or hw_tile == HW), \
        "hw_tile must divide HW and be a multiple of 128 (or equal HW)"
    num_hw_tiles = HW // hw_tile

    # Explicit VMEM budget: 2x (double-buffered) x tile + 2x resident output block
    # + params + scratch, with headroom; clamp to [32 MiB, 64 MiB] (safe on v5e/v6e/v7x).
    est = (2 * Cin * hw_tile * itemsize
           + 2 * Cout * HW * itemsize
           + pool * Cout * Cin * itemsize + pool * Cout * 4 + 2 * Cout * 4
           + 2 * Cout * 4)
    vmem_limit = int(min(max(2 * est, 32 * 1024 * 1024), 64 * 1024 * 1024))

    kernel = functools.partial(_maxout2d_kernel, pool=pool, hw_tile=hw_tile,
                               inv_hw=1.0 / HW, eps=eps)

    out_ncl = pl.pallas_call(
        kernel,
        out_shape=jax.ShapeDtypeStruct((N, Cout, HW), dt),
        grid=(N, num_hw_tiles),
        in_specs=[
            pl.BlockSpec((1, Cin, hw_tile), lambda n, t: (n, 0, t)),
            pl.BlockSpec((pool, Cout, Cin), lambda n, t: (0, 0, 0)),
            pl.BlockSpec((pool, Cout, 1), lambda n, t: (0, 0, 0)),
            pl.BlockSpec((Cout, 1), lambda n, t: (0, 0)),
            pl.BlockSpec((Cout, 1), lambda n, t: (0, 0)),
        ],
        out_specs=pl.BlockSpec((1, Cout, HW), lambda n, t: (n, 0, 0)),
        scratch_shapes=[
            pltpu.VMEM((Cout, 1), jnp.float32),   # running sum
            pltpu.VMEM((Cout, 1), jnp.float32),   # running sum of squares
        ],
        compiler_params=pltpu.CompilerParams(
            dimension_semantics=("parallel", "arbitrary"),
            vmem_limit_bytes=vmem_limit),
    )(x_ncl, w_pjc, b_pj, g2, be2)

    # (N, Cout, HW) -> NCHW is again a free reshape.
    return out_ncl.reshape(N, Cout, H, W)


def maxout2d_reference(x_nchw, conv_w, conv_b, gamma, beta, *, pool, eps=1e-5):
    """Pure-JAX reference matching the PyTorch forward."""
    N, Cin, H, W = x_nchw.shape
    Cout = conv_w.shape[0] // pool
    w2d = conv_w.reshape(Cout * pool, Cin)
    lin = jnp.einsum('nihw,oi->nohw', x_nchw, w2d) + conv_b[None, :, None, None]
    m = lin.reshape(N, Cout, pool, H, W).max(axis=2)
    mean = m.mean(axis=(2, 3), keepdims=True)
    var = ((m - mean) ** 2).mean(axis=(2, 3), keepdims=True)
    y = (m - mean) / jnp.sqrt(var + eps)
    return y * gamma[None, :, None, None] + beta[None, :, None, None]


if __name__ == "__main__":
    # Small deterministic config consistent with the module (kernel_size=1 default).
    N, Cin, H, W = 2, 4, 16, 16
    Cout, pool = 4, 3

    key = jax.random.PRNGKey(0)
    kx, kw, kb = jax.random.split(key, 3)

    x = jax.random.normal(kx, (N, Cin, H, W), dtype=jnp.float32)

    # Conv2d weight: xavier_uniform with gain=sqrt(2); shape (Cout*pool, Cin, 1, 1)
    fan_in, fan_out = Cin * 1 * 1, Cout * pool * 1 * 1
    bound = sqrt(2.0) * sqrt(6.0 / (fan_in + fan_out))
    conv_w = jax.random.uniform(kw, (Cout * pool, Cin, 1, 1),
                                minval=-bound, maxval=bound, dtype=jnp.float32)
    # Conv2d bias: PyTorch default uniform(-1/sqrt(fan_in), 1/sqrt(fan_in))
    bb = 1.0 / sqrt(fan_in)
    conv_b = jax.random.uniform(kb, (Cout * pool,), minval=-bb, maxval=bb,
                                dtype=jnp.float32)
    # InstanceNorm2d affine params: PyTorch default init (ones / zeros)
    gamma = jnp.ones((Cout,), dtype=jnp.float32)
    beta = jnp.zeros((Cout,), dtype=jnp.float32)

    ref = maxout2d_reference(x, conv_w, conv_b, gamma, beta, pool=pool)

    # f32, auto HW tile (single block for this small spatial size)
    out = maxout2d_pallas(x, conv_w, conv_b, gamma, beta, pool=pool)
    out = jax.block_until_ready(out)
    assert out.shape == (N, Cout, H, W)
    assert jnp.allclose(out, ref, atol=2e-4, rtol=2e-4), "f32 (single tile) mismatch"

    # f32, forced hw_tile=128 -> exercises the HW-tiled accumulator / finalize path
    out_t = maxout2d_pallas(x, conv_w, conv_b, gamma, beta, pool=pool, hw_tile=128)
    out_t = jax.block_until_ready(out_t)
    assert jnp.allclose(out_t, ref, atol=2e-4, rtol=2e-4), "f32 (tiled) mismatch"

    # bf16 activation path (halves HBM traffic on real sizes); looser tolerance
    out_bf = maxout2d_pallas(x.astype(jnp.bfloat16), conv_w, conv_b, gamma, beta,
                             pool=pool, hw_tile=128)
    out_bf = jax.block_until_ready(out_bf)
    assert out_bf.dtype == jnp.bfloat16
    assert jnp.allclose(out_bf.astype(jnp.float32), ref, atol=1e-1, rtol=1e-1), \
        "bf16 mismatch"

    print("KERNEL_OK")
</pallas_src>

<mosaic_0001>
module attributes {stable_mosaic.version = 11 : i64} {
  func.func @_maxout2d_kernel(%arg0: i32, %arg1: i32, %arg2: memref<1x4x256xf32, #tpu.memory_space<vmem>>, %arg3: memref<3x4x4xf32, #tpu.memory_space<vmem>>, %arg4: memref<3x4x1xf32, #tpu.memory_space<vmem>>, %arg5: memref<4x1xf32, #tpu.memory_space<vmem>>, %arg6: memref<4x1xf32, #tpu.memory_space<vmem>>, %arg7: memref<1x4x256xf32, #tpu.memory_space<vmem>>, %arg8: memref<4x1xf32, #tpu.memory_space<vmem>>, %arg9: memref<4x1xf32, #tpu.memory_space<vmem>>) attributes {dimension_semantics = [#tpu.dimension_semantics<parallel>, #tpu.dimension_semantics<arbitrary>], iteration_bounds = array<i64: 2, 1>, scalar_prefetch = 0 : i64, scratch_operands = 2 : i64, tpu.core_type = #tpu.core_type<tc>, window_params = [{transform_indices = @transform_0, window_bounds = array<i64: 1, 4, 256>}, {pipeline_mode = #tpu.pipeline_mode<synchronous>, transform_indices = @transform_1, window_bounds = array<i64: 3, 4, 4>}, {pipeline_mode = #tpu.pipeline_mode<synchronous>, transform_indices = @transform_2, window_bounds = array<i64: 3, 4, 1>}, {pipeline_mode = #tpu.pipeline_mode<synchronous>, transform_indices = @transform_3, window_bounds = array<i64: 4, 1>}, {pipeline_mode = #tpu.pipeline_mode<synchronous>, transform_indices = @transform_4, window_bounds = array<i64: 4, 1>}, {transform_indices = @transform_5, window_bounds = array<i64: 1, 4, 256>}]} {
    %c0_i32 = arith.constant 0 : i32
    %0 = arith.cmpi eq, %arg1, %c0_i32 : i32
    %1 = arith.extui %0 : i1 to i32
    %c0_i32_0 = arith.constant 0 : i32
    %2 = arith.cmpi ne, %1, %c0_i32_0 : i32
    scf.if %2 {
      %cst_35 = arith.constant 0.000000e+00 : f32
      %48 = vector.broadcast %cst_35 : f32 to vector<4x1xf32>
      %c0_36 = arith.constant 0 : index
      %c0_37 = arith.constant 0 : index
      %49 = vector.load %arg8[%c0_36, %c0_37] : memref<4x1xf32, #tpu.memory_space<vmem>>, vector<4x1xf32>
      tpu.vector_store %arg8[%c0_36, %c0_37], %48 {strides = array<i32>} : memref<4x1xf32, #tpu.memory_space<vmem>>, vector<4x1xf32>,
      %cst_38 = arith.constant 0.000000e+00 : f32
      %50 = vector.broadcast %cst_38 : f32 to vector<4x1xf32>
      %c0_39 = arith.constant 0 : index
      %c0_40 = arith.constant 0 : index
      %51 = vector.load %arg9[%c0_39, %c0_40] : memref<4x1xf32, #tpu.memory_space<vmem>>, vector<4x1xf32>
      tpu.vector_store %arg9[%c0_39, %c0_40], %50 {strides = array<i32>} : memref<4x1xf32, #tpu.memory_space<vmem>>, vector<4x1xf32>,
    } else {
    }
    %c0 = arith.constant 0 : index
    %c0_1 = arith.constant 0 : index
    %c0_2 = arith.constant 0 : index
    %3 = vector.load %arg2[%c0, %c0_1, %c0_2] : memref<1x4x256xf32, #tpu.memory_space<vmem>>, vector<1x4x256xf32>
    %4 = vector.shape_cast %3 : vector<1x4x256xf32> to vector<4x256xf32>
    %c0_3 = arith.constant 0 : index
    %c0_4 = arith.constant 0 : index
    %c0_5 = arith.constant 0 : index
    %5 = vector.load %arg3[%c0_3, %c0_4, %c0_5] : memref<3x4x4xf32, #tpu.memory_space<vmem>>, vector<1x4x4xf32>
    %6 = vector.shape_cast %5 : vector<1x4x4xf32> to vector<4x4xf32>
    %cst = arith.constant dense<0.000000e+00> : vector<4x256xf32>
    %7 = tpu.matmul %6, %4, %cst {dimension_numbers = #tpu.dot_dimension_numbers<[1], [0], [0], [1], [0, 0, 1, 1], [], []>} : vector<4x4xf32>, vector<4x256xf32>, vector<4x256xf32> -> vector<4x256xf32>
    %c0_6 = arith.constant 0 : index
    %c0_7 = arith.constant 0 : index
    %c0_8 = arith.constant 0 : index
    %8 = vector.load %arg4[%c0_6, %c0_7, %c0_8] : memref<3x4x1xf32, #tpu.memory_space<vmem>>, vector<1x4x1xf32>
    %9 = vector.shape_cast %8 : vector<1x4x1xf32> to vector<4x1xf32>
    %10 = vector.broadcast %9 : vector<4x1xf32> to vector<4x256xf32>
    %11 = arith.addf %7, %10 : vector<4x256xf32>
    %c1 = arith.constant 1 : index
    %c0_9 = arith.constant 0 : index
    %c0_10 = arith.constant 0 : index
    %12 = vector.load %arg3[%c1, %c0_9, %c0_10] : memref<3x4x4xf32, #tpu.memory_space<vmem>>, vector<1x4x4xf32>
    %13 = vector.shape_cast %12 : vector<1x4x4xf32> to vector<4x4xf32>
    %cst_11 = arith.constant dense<0.000000e+00> : vector<4x256xf32>
    %14 = tpu.matmul %13, %4, %cst_11 {dimension_numbers = #tpu.dot_dimension_numbers<[1], [0], [0], [1], [0, 0, 1, 1], [], []>} : vector<4x4xf32>, vector<4x256xf32>, vector<4x256xf32> -> vector<4x256xf32>
    %c1_12 = arith.constant 1 : index
    %c0_13 = arith.constant 0 : index
    %c0_14 = arith.constant 0 : index
    %15 = vector.load %arg4[%c1_12, %c0_13, %c0_14] : memref<3x4x1xf32, #tpu.memory_space<vmem>>, vector<1x4x1xf32>
    %16 = vector.shape_cast %15 : vector<1x4x1xf32> to vector<4x1xf32>
    %17 = vector.broadcast %16 : vector<4x1xf32> to vector<4x256xf32>
    %18 = arith.addf %14, %17 : vector<4x256xf32>
    %19 = arith.maximumf %11, %18 : vector<4x256xf32>
    %c2 = arith.constant 2 : index
    %c0_15 = arith.constant 0 : index
    %c0_16 = arith.constant 0 : index
    %20 = vector.load %arg3[%c2, %c0_15, %c0_16] : memref<3x4x4xf32, #tpu.memory_space<vmem>>, vector<1x4x4xf32>
    %21 = vector.shape_cast %20 : vector<1x4x4xf32> to vector<4x4xf32>
    %cst_17 = arith.constant dense<0.000000e+00> : vector<4x256xf32>
    %22 = tpu.matmul %21, %4, %cst_17 {dimension_numbers = #tpu.dot_dimension_numbers<[1], [0], [0], [1], [0, 0, 1, 1], [], []>} : vector<4x4xf32>, vector<4x256xf32>, vector<4x256xf32> -> vector<4x256xf32>
    %c2_18 = arith.constant 2 : index
    %c0_19 = arith.constant 0 : index
    %c0_20 = arith.constant 0 : index
    %23 = vector.load %arg4[%c2_18, %c0_19, %c0_20] : memref<3x4x1xf32, #tpu.memory_space<vmem>>, vector<1x4x1xf32>
    %24 = vector.shape_cast %23 : vector<1x4x1xf32> to vector<4x1xf32>
    %25 = vector.broadcast %24 : vector<4x1xf32> to vector<4x256xf32>
    %26 = arith.addf %22, %25 : vector<4x256xf32>
    %27 = arith.maximumf %19, %26 : vector<4x256xf32>
    %c0_21 = arith.constant 0 : index
    %c0_22 = arith.constant 0 : index
    %28 = vector.load %arg8[%c0_21, %c0_22] : memref<4x1xf32, #tpu.memory_space<vmem>>, vector<4x1xf32>
    %cst_23 = arith.constant dense<0.000000e+00> : vector<4xf32>
    %29 = vector.multi_reduction <add>, %27, %cst_23 [1] : vector<4x256xf32> to vector<4xf32>
    %30 = vector.shape_cast %29 : vector<4xf32> to vector<4x1xf32>
    %31 = arith.addf %28, %30 : vector<4x1xf32>
    %c0_24 = arith.constant 0 : index
    %c0_25 = arith.constant 0 : index
    %32 = vector.load %arg8[%c0_24, %c0_25] : memref<4x1xf32, #tpu.memory_space<vmem>>, vector<4x1xf32>
    tpu.vector_store %arg8[%c0_24, %c0_25], %31 {strides = array<i32>} : memref<4x1xf32, #tpu.memory_space<vmem>>, vector<4x1xf32>,
    %c0_26 = arith.constant 0 : index
    %c0_27 = arith.constant 0 : index
    %33 = vector.load %arg9[%c0_26, %c0_27] : memref<4x1xf32, #tpu.memory_space<vmem>>, vector<4x1xf32>
    %34 = arith.mulf %27, %27 : vector<4x256xf32>
    %cst_28 = arith.constant dense<0.000000e+00> : vector<4xf32>
    %35 = vector.multi_reduction <add>, %34, %cst_28 [1] : vector<4x256xf32> to vector<4xf32>
    %36 = vector.shape_cast %35 : vector<4xf32> to vector<4x1xf32>
    %37 = arith.addf %33, %36 : vector<4x1xf32>
    %c0_29 = arith.constant 0 : index
    %c0_30 = arith.constant 0 : index
    %38 = vector.load %arg9[%c0_29, %c0_30] : memref<4x1xf32, #tpu.memory_space<vmem>>, vector<4x1xf32>
    tpu.vector_store %arg9[%c0_29, %c0_30], %37 {strides = array<i32>} : memref<4x1xf32, #tpu.memory_space<vmem>>, vector<4x1xf32>,
    %c256_i32 = arith.constant 256 : i32
    %39 = arith.muli %arg1, %c256_i32 : i32
    %40 = tpu.assume_multiple %39, 256 : i32
    %c0_31 = arith.constant 0 : index
    %c0_32 = arith.constant 0 : index
    %41 = arith.index_cast %40 : i32 to index
    %42 = vector.load %arg7[%c0_31, %c0_32, %41] : memref<1x4x256xf32, #tpu.memory_space<vmem>>, vector<1x4x256xf32>
    %43 = vector.shape_cast %42 : vector<1x4x256xf32> to vector<4x256xf32>
    %44 = vector.shape_cast %27 : vector<4x256xf32> to vector<1x4x256xf32>
    tpu.vector_store %arg7[%c0_31, %c0_32, %41], %44 {strides = array<i32>} : memref<1x4x256xf32, #tpu.memory_space<vmem>>, vector<1x4x256xf32>,
    %c0_i32_33 = arith.constant 0 : i32
    %45 = arith.cmpi eq, %arg1, %c0_i32_33 : i32
    %46 = arith.extui %45 : i1 to i32
    %c0_i32_34 = arith.constant 0 : i32
    %47 = arith.cmpi ne, %46, %c0_i32_34 : i32
    scf.if %47 {
      %c0_35 = arith.constant 0 : index
      %c0_36 = arith.constant 0 : index
      %48 = vector.load %arg8[%c0_35, %c0_36] : memref<4x1xf32, #tpu.memory_space<vmem>>, vector<4x1xf32>
      %cst_37 = arith.constant 3.906250e-03 : f32
      %49 = vector.broadcast %cst_37 : f32 to vector<4x1xf32>
      %50 = arith.mulf %48, %49 : vector<4x1xf32>
      %c0_38 = arith.constant 0 : index
      %c0_39 = arith.constant 0 : index
      %51 = vector.load %arg9[%c0_38, %c0_39] : memref<4x1xf32, #tpu.memory_space<vmem>>, vector<4x1xf32>
      %cst_40 = arith.constant 3.906250e-03 : f32
      %52 = vector.broadcast %cst_40 : f32 to vector<4x1xf32>
      %53 = arith.mulf %51, %52 : vector<4x1xf32>
      %54 = arith.mulf %50, %50 : vector<4x1xf32>
      %55 = arith.subf %53, %54 : vector<4x1xf32>
      %cst_41 = arith.constant 9.99999974E-6 : f32
      %56 = vector.broadcast %cst_41 : f32 to vector<4x1xf32>
      %57 = arith.addf %55, %56 : vector<4x1xf32>
      %58 = math.rsqrt %57 : vector<4x1xf32>
      %c0_42 = arith.constant 0 : index
      %c0_43 = arith.constant 0 : index
      %59 = vector.load %arg5[%c0_42, %c0_43] : memref<4x1xf32, #tpu.memory_space<vmem>>, vector<4x1xf32>
      %60 = arith.mulf %59, %58 : vector<4x1xf32>
      %c0_44 = arith.constant 0 : index
      %c0_45 = arith.constant 0 : index
      %61 = vector.load %arg6[%c0_44, %c0_45] : memref<4x1xf32, #tpu.memory_space<vmem>>, vector<4x1xf32>
      %62 = arith.mulf %50, %60 : vector<4x1xf32>
      %63 = arith.subf %61, %62 : vector<4x1xf32>
      %c0_46 = arith.constant 0 : index
      %c0_47 = arith.constant 0 : index
      %c0_48 = arith.constant 0 : index
      %64 = vector.load %arg7[%c0_46, %c0_47, %c0_48] : memref<1x4x256xf32, #tpu.memory_space<vmem>>, vector<1x4x256xf32>
      %65 = vector.shape_cast %64 : vector<1x4x256xf32> to vector<4x256xf32>
      %66 = vector.broadcast %60 : vector<4x1xf32> to vector<4x256xf32>
      %67 = arith.mulf %65, %66 : vector<4x256xf32>
      %68 = vector.broadcast %63 : vector<4x1xf32> to vector<4x256xf32>
      %69 = arith.addf %67, %68 : vector<4x256xf32>
      %c0_49 = arith.constant 0 : index
      %c0_50 = arith.constant 0 : index
      %c0_51 = arith.constant 0 : index
      %70 = vector.load %arg7[%c0_49, %c0_50, %c0_51] : memref<1x4x256xf32, #tpu.memory_space<vmem>>, vector<1x4x256xf32>
      %71 = vector.shape_cast %70 : vector<1x4x256xf32> to vector<4x256xf32>
      %72 = vector.shape_cast %69 : vector<4x256xf32> to vector<1x4x256xf32>
      tpu.vector_store %arg7[%c0_49, %c0_50, %c0_51], %72 {strides = array<i32>} : memref<1x4x256xf32, #tpu.memory_space<vmem>>, vector<1x4x256xf32>,
    } else {
    }
    return
  }
  func.func @transform_0(%arg0: i32, %arg1: i32) -> (i32, i32, i32) {
    %c0_i32 = arith.constant 0 : i32
    %c0_i32_0 = arith.constant 0 : i32
    return %arg0, %c0_i32, %arg1 : i32, i32, i32
  }
  func.func @transform_1(%arg0: i32, %arg1: i32) -> (i32, i32, i32) {
    %c0_i32 = arith.constant 0 : i32
    %c0_i32_0 = arith.constant 0 : i32
    %c0_i32_1 = arith.constant 0 : i32
    %c0_i32_2 = arith.constant 0 : i32
    return %c0_i32, %c0_i32_0, %c0_i32_1 : i32, i32, i32
  }
  func.func @transform_2(%arg0: i32, %arg1: i32) -> (i32, i32, i32) {
    %c0_i32 = arith.constant 0 : i32
    %c0_i32_0 = arith.constant 0 : i32
    %c0_i32_1 = arith.constant 0 : i32
    %c0_i32_2 = arith.constant 0 : i32
    return %c0_i32, %c0_i32_0, %c0_i32_1 : i32, i32, i32
  }
  func.func @transform_3(%arg0: i32, %arg1: i32) -> (i32, i32) {
    %c0_i32 = arith.constant 0 : i32
    %c0_i32_0 = arith.constant 0 : i32
    %c0_i32_1 = arith.constant 0 : i32
    return %c0_i32, %c0_i32_0 : i32, i32
  }
  func.func @transform_4(%arg0: i32, %arg1: i32) -> (i32, i32) {
    %c0_i32 = arith.constant 0 : i32
    %c0_i32_0 = arith.constant 0 : i32
    %c0_i32_1 = arith.constant 0 : i32
    return %c0_i32, %c0_i32_0 : i32, i32
  }
  func.func @transform_5(%arg0: i32, %arg1: i32) -> (i32, i32, i32) {
    %c0_i32 = arith.constant 0 : i32
    %c0_i32_0 = arith.constant 0 : i32
    %c0_i32_1 = arith.constant 0 : i32
    return %arg0, %c0_i32, %c0_i32_0 : i32, i32, i32
  }
}

</mosaic_0001>

<llo_original>
// kernel: tpu_custom_call.1
$region0: #{tpu_custom_call.1}
  #allocation0 [shape = 'u32[]', space=smem, size = 0x4, offset = 0x4, fixed_abs, tag = 'smem constant byte address 0x4 - core index']
  #allocation1 [shape = 'u32[72,128]{1,0:T(1,128)}', space=vmem, size = 0x9000, scoped, tag = 'internal scratch']
  #allocation2 [shape = 'f32[4,1]{1,0:T(4,128)}', space=vmem, size = 0x800, scoped, tag = 'scratch operand']
  #allocation3 [shape = 'f32[4,1]{1,0:T(4,128)}', space=vmem, size = 0x800, scoped, tag = 'scratch operand']
  %s0 = inlined_call_operand.vmem [shape: f32[2,4,256], index: 0, kind: input, shape index: {}]
  %s1 = inlined_call_operand.hbm [shape: f32[3,4,4], index: 1, kind: input, shape index: {}]
  %s2 = inlined_call_operand.vmem [shape: f32[3,4,1], index: 2, kind: input, shape index: {}]
  %s3 = inlined_call_operand.vmem [shape: f32[4,1], index: 3, kind: input, shape index: {}]
  %s4 = inlined_call_operand.vmem [shape: f32[4,1], index: 4, kind: input, shape index: {}]
  %s5 = inlined_call_operand.hbm [shape: f32[2,4,256], index: 5, kind: output, shape index: {}]
  %s6 = sld [smem:[#allocation0]]
  $region65: #{tpu_custom_call.1} parent=0
    _
  %s8 = ssub.s32 1, %s6
  %s9 = scalar_select 0, %s8, %s6
  $region1: #{tpu_custom_call.1} parent=0
    #allocation4 [shape = 'u8[6144]{0}', space=vmem, size = 0x1800, scoped, tag = 'input window, operand 1, single buffered']
    #allocation5 [shape = 's32[2]{0}', space=sflag, size = 0x8, scoped, tag = 'scoped memory for tpu_custom_call.1']
    #allocation6 [shape = 's32[2]{0}', space=sflag, size = 0x8, scoped, tag = 'scoped memory for tpu_custom_call.1']
    #allocation7 [shape = 'u8[8192]{0}', space=vmem, size = 0x2000, scoped, tag = 'output window, operand 0']
    %10 = vsyncpa [#allocation5], 0
    %11 = vsyncpa [#allocation6], 0
    %s12 = scalar_lea.sflag [#allocation6], 1
    %13 = vsyncpa %s12, 0
    loop: start=0, step=1, limit=4
    $region2: #{tpu_custom_call.1} parent=1 // loop_pre_header
      _
    $region3: #{tpu_custom_call.1} parent=1 // loop_header
      %s15 = sphi 0, %s19
      %p16 = scmp.ge.s32.totalorder %s15, 4
      %s22 = sphi 0, %s34
      %s23 = sphi 0, %s30
      %s24 = sphi 0, %s22
      %s25 = sphi 0, %s23
      %s26 = sphi 0, %s24
      %s27 = sphi 0, %s25
      %s39 = sphi 0, %s41
      %s42 = sphi 0, %s39
      %s43 = sphi 0, %s42
      %s59 = sphi 0, %s43
      %s63 = sphi 0, %s63
      %s65 = sphi 0, %s63
      %s66 = sphi 0, %s65
      %s80 = sphi 0, %s66
      %s84 = sphi 0, %s84
      %s86 = sphi 0, %s84
      %s87 = sphi 0, %s86
      %s101 = sphi 0, %s87
      %s105 = sphi 0, %s105
      %s107 = sphi 0, %s105
      %s108 = sphi 0, %s107
      %s122 = sphi 0, %s108
      %s126 = sphi 0, %s126
      %s128 = sphi 0, %s126
      %s129 = sphi 0, %s128
      %s143 = sphi 0, %s129
      %s149 = sphi 0, %s151
      %s152 = sphi 0, %s149
      %s153 = sphi 0, %s152
      %s169 = sphi 0, %s153
    $region4: #{tpu_custom_call.1} parent=1 // loop_header_branch
      %18 = sbr.rel (%p16) target = $region8
    $region5: #{tpu_custom_call.1} parent=1 // loop_body
      %s20 = ssub.s32 %s15, 1
      %s21 = ssub.s32 %s15, 2
      %s28 = sadd.s32 1, %s23
      %p29 = scmp.ge.s32.totalorder %s28, 1
      %s30 = scalar_select %p29, 0, %s28
      %s31 = sadd.s32 1, %s22
      %s32 = scalar_select %p29, %s31, %s22
      %p33 = scmp.ge.s32.totalorder %s32, 2
      %s34 = scalar_select %p33, 0, %s32
      %s35 = ssub.s32 %s22, %s34
      %s36 = ssub.s32 %s23, %s30
      %s37 = sor.u32 %s35, %s36
      %p38 = scmp.eq.s32.totalorder %s37, 0
      %s40 = sadd.s32 %s39, 1
      %s41 = scalar_select %p38, %s39, %s40
      %p44 = pneg %p38
      %p45 = scmp.eq.s32.totalorder %s15, 1
      %p46 = por %p44, %p45
      %p47 = scmp.ne.s32.totalorder %s39, %s42
      %p48 = scmp.eq.s32.totalorder %s15, 0
      %p49 = por %p47, %p48
      %p50 = scmp.ne.s32.totalorder %s39, %s42
      %p51 = scmp.eq.s32.totalorder %s20, 1
      %p52 = por %p50, %p51
      %p53 = scmp.ne.s32.totalorder %s42, %s43
      %p54 = scmp.eq.s32.totalorder %s20, 0
      %p55 = por %p53, %p54
      %p56 = scmp.ne.s32.totalorder %s42, %s43
      %p57 = scmp.eq.s32.totalorder %s21, 1
      %p58 = por %p56, %p57
      %p60 = scmp.ne.s32.totalorder %s43, %s59
      %p61 = scmp.eq.s32.totalorder %s21, 0
      %p62 = por %p60, %p61
      %s64 = sadd.s32 %s63, 1
      %p67 = scmp.eq.s32.totalorder %s15, 1
      %p68 = scmp.ne.s32.totalorder %s63, %s65
      %p69 = scmp.eq.s32.totalorder %s15, 0
      %p70 = por %p68, %p69
      %p71 = scmp.ne.s32.totalorder %s63, %s65
      %p72 = scmp.eq.s32.totalorder %s20, 1
      %p73 = por %p71, %p72
      %p74 = scmp.ne.s32.totalorder %s65, %s66
      %p75 = scmp.eq.s32.totalorder %s20, 0
      %p76 = por %p74, %p75
      %p77 = scmp.ne.s32.totalorder %s65, %s66
      %p78 = scmp.eq.s32.totalorder %s21, 1
      %p79 = por %p77, %p78
      %p81 = scmp.ne.s32.totalorder %s66, %s80
      %p82 = scmp.eq.s32.totalorder %s21, 0
      %p83 = por %p81, %p82
      %s85 = sadd.s32 %s84, 1
      %p88 = scmp.eq.s32.totalorder %s15, 1
      %p89 = scmp.ne.s32.totalorder %s84, %s86
      %p90 = scmp.eq.s32.totalorder %s15, 0
      %p91 = por %p89, %p90
      %p92 = scmp.ne.s32.totalorder %s84, %s86
      %p93 = scmp.eq.s32.totalorder %s20, 1
      %p94 = por %p92, %p93
      %p95 = scmp.ne.s32.totalorder %s86, %s87
      %p96 = scmp.eq.s32.totalorder %s20, 0
      %p97 = por %p95, %p96
      %p98 = scmp.ne.s32.totalorder %s86, %s87
      %p99 = scmp.eq.s32.totalorder %s21, 1
      %p100 = por %p98, %p99
      %p102 = scmp.ne.s32.totalorder %s87, %s101
      %p103 = scmp.eq.s32.totalorder %s21, 0
      %p104 = por %p102, %p103
      %s106 = sadd.s32 %s105, 1
      %p109 = scmp.eq.s32.totalorder %s15, 1
      %p110 = scmp.ne.s32.totalorder %s105, %s107
      %p111 = scmp.eq.s32.totalorder %s15, 0
      %p112 = por %p110, %p111
      %p113 = scmp.ne.s32.totalorder %s105, %s107
      %p114 = scmp.eq.s32.totalorder %s20, 1
      %p115 = por %p113, %p114
      %p116 = scmp.ne.s32.totalorder %s107, %s108
      %p117 = scmp.eq.s32.totalorder %s20, 0
      %p118 = por %p116, %p117
      %p119 = scmp.ne.s32.totalorder %s107, %s108
      %p120 = scmp.eq.s32.totalorder %s21, 1
      %p121 = por %p119, %p120
      %p123 = scmp.ne.s32.totalorder %s108, %s122
      %p124 = scmp.eq.s32.totalorder %s21, 0
      %p125 = por %p123, %p124
      %s127 = sadd.s32 %s126, 1
      %p130 = scmp.eq.s32.totalorder %s15, 1
      %p131 = scmp.ne.s32.totalorder %s126, %s128
      %p132 = scmp.eq.s32.totalorder %s15, 0
      %p133 = por %p131, %p132
      %p134 = scmp.ne.s32.totalorder %s126, %s128
      %p135 = scmp.eq.s32.totalorder %s20, 1
      %p136 = por %p134, %p135
      %p137 = scmp.ne.s32.totalorder %s128, %s129
      %p138 = scmp.eq.s32.totalorder %s20, 0
      %p139 = por %p137, %p138
      %p140 = scmp.ne.s32.totalorder %s128, %s129
      %p141 = scmp.eq.s32.totalorder %s21, 1
      %p142 = por %p140, %p141
      %p144 = scmp.ne.s32.totalorder %s129, %s143
      %p145 = scmp.eq.s32.totalorder %s21, 0
      %p146 = por %p144, %p145
      %s147 = ssub.s32 %s22, %s34
      %p148 = scmp.eq.s32.totalorder %s147, 0
      %s150 = sadd.s32 %s149, 1
      %s151 = scalar_select %p148, %s149, %s150
      %p154 = pneg %p148
      %p155 = scmp.eq.s32.totalorder %s15, 1
      %p156 = por %p154, %p155
      %p157 = scmp.ne.s32.totalorder %s149, %s152
      %p158 = scmp.eq.s32.totalorder %s15, 0
      %p159 = por %p157, %p158
      %p160 = scmp.ne.s32.totalorder %s149, %s152
      %p161 = scmp.eq.s32.totalorder %s20, 1
      %p162 = por %p160, %p161
      %p163 = scmp.ne.s32.totalorder %s152, %s153
      %p164 = scmp.eq.s32.totalorder %s20, 0
      %p165 = por %p163, %p164
      %p166 = scmp.ne.s32.totalorder %s152, %s153
      %p167 = scmp.eq.s32.totalorder %s21, 1
      %p168 = por %p166, %p167
      %p170 = scmp.ne.s32.totalorder %s153, %s169
      %p171 = scmp.eq.s32.totalorder %s21, 0
      %p172 = por %p170, %p171
      %p173 = scmp.le.s32.totalorder 1, %s15
      %p174 = scmp.lt.s32.totalorder %s15, 3
      %p175 = pnand %p173, %p174
      %p176 = pneg %p175
      // Predicated region
      $region9: #{tpu_custom_call.1} parent=5 // pred_check
        _
      $region10: #{tpu_custom_call.1} parent=5 // pred_check_branch
        %178 = sbr.rel (%p175) target = $region12
      $region11: #{tpu_custom_call.1} parent=5 // pred_region
        %s179 = ssub.s32 %s15, 1
        // Predicated region
        $region13: #{tpu_custom_call.1} parent=11 // pred_check
          %p180 = pneg %p76
        $region14: #{tpu_custom_call.1} parent=11 // pred_check_branch
          %182 = sbr.rel (%p180) target = $region16
        $region15: #{tpu_custom_call.1} parent=11 // pred_region
          %184 = vsyncadd [#allocation5], 0
          %s185 = sshll.u32 %s1, 4
          %s186 = int_to_ptr.hbm [resolvable:$true] %s185
          %s187 = sshll.u32 [#allocation4], 4
          %s188 = int_to_ptr.vmem [resolvable:$true] %s187
          %193 = dma.hbm_to_vmem [thread:$0]  %s186, 192, %s188, [#allocation5], 64, 64, 4
        $region16: #{tpu_custom_call.1} parent=11 // pred_fallthru
          _
        // Predicated region
        $region17: #{tpu_custom_call.1} parent=11 // pred_check
          %p194 = pneg %p97
        $region18: #{tpu_custom_call.1} parent=11 // pred_check_branch
          %196 = sbr.rel (%p194) target = $region20
        $region19: #{tpu_custom_call.1} parent=11 // pred_region
          _
        $region20: #{tpu_custom_call.1} parent=11 // pred_fallthru
          _
        // Predicated region
        $region21: #{tpu_custom_call.1} parent=11 // pred_check
          %p197 = pneg %p118
        $region22: #{tpu_custom_call.1} parent=11 // pred_check_branch
          %199 = sbr.rel (%p197) target = $region24
        $region23: #{tpu_custom_call.1} parent=11 // pred_region
          _
        $region24: #{tpu_custom_call.1} parent=11 // pred_fallthru
          _
        // Predicated region
        $region25: #{tpu_custom_call.1} parent=11 // pred_check
          %p200 = pneg %p139
        $region26: #{tpu_custom_call.1} parent=11 // pred_check_branch
          %202 = sbr.rel (%p200) target = $region28
        $region27: #{tpu_custom_call.1} parent=11 // pred_region
          _
        $region28: #{tpu_custom_call.1} parent=11 // pred_fallthru
          _
      $region12: #{tpu_custom_call.1} parent=5 // pred_fallthru
        _
      %p203 = scmp.lt.s32.totalorder %s15, 2
      // Predicated region
      $region29: #{tpu_custom_call.1} parent=5 // pred_check
        %p204 = pneg %p203
      $region30: #{tpu_custom_call.1} parent=5 // pred_check_branch
        %206 = sbr.rel (%p204) target = $region32
      $region31: #{tpu_custom_call.1} parent=5 // pred_region
        // Predicated region
        $region33: #{tpu_custom_call.1} parent=31 // pred_check
          %p207 = pneg %p49
        $region34: #{tpu_custom_call.1} parent=31 // pred_check_branch
          %209 = sbr.rel (%p207) target = $region36
        $region35: #{tpu_custom_call.1} parent=31 // pred_region
          %s210 = smul.u32 2, %s23
          %p211 = scmp.lt.s32.totalorder %s22, 1
          %s212 = scalar_select %p211, %s22, 1
          %p213 = scmp.lt.s32.totalorder %s210, 1
          %s214 = scalar_select %p213, %s210, 1
          %s215 = smul.addr %s212, 2
          %s216 = sadd.s32 %s214, %s215
          %s217 = smul.addr %s216, 4
          %s218 = scalar_lea.vmem %s0, %s217
          %s219 = smul.u32 2, %s23
        $region36: #{tpu_custom_call.1} parent=31 // pred_fallthru
          _
      $region32: #{tpu_custom_call.1} parent=5 // pred_fallthru
        _
      %p220 = scmp.le.s32.totalorder 1, %s15
      %p221 = scmp.lt.s32.totalorder %s15, 3
      %p222 = pnand %p220, %p221
      %p223 = pneg %p222
      // Predicated region
      $region37: #{tpu_custom_call.1} parent=5 // pred_check
        _
      $region38: #{tpu_custom_call.1} parent=5 // pred_check_branch
        %225 = sbr.rel (%p222) target = $region40
      $region39: #{tpu_custom_call.1} parent=5 // pred_region
        %s226 = ssub.s32 %s15, 1
        // Predicated region
        $region41: #{tpu_custom_call.1} parent=39 // pred_check
          %p227 = pneg %p76
        $region42: #{tpu_custom_call.1} parent=39 // pred_check_branch
          %229 = sbr.rel (%p227) target = $region44
        $region43: #{tpu_custom_call.1} parent=39 // pred_region
          %231 = dma.done [#allocation5], 192
        $region44: #{tpu_custom_call.1} parent=39 // pred_fallthru
          _
        %s232 = smul.u32 2, %s25
        %p233 = scmp.lt.s32.totalorder %s24, 1
        %s234 = scalar_select %p233, %s24, 1
        %p235 = scmp.lt.s32.totalorder %s232, 1
        %s236 = scalar_select %p235, %s232, 1
        %s237 = smul.addr %s234, 2
        %s238 = sadd.s32 %s236, %s237
        %s239 = smul.addr %s238, 4
        %s240 = scalar_lea.vmem %s0, %s239
        %p241 = pneg %p55
        %p242 = pneg %p52
        %p243 = pneg %p76
        %p244 = pneg %p73
        %p245 = pneg %p97
        %p246 = pneg %p94
        %p247 = pneg %p118
        %p248 = pneg %p115
        %p249 = pneg %p139
        %p250 = pneg %p136
        %p251 = pneg %p165
        %p252 = pneg %p162
        %s253 = sand.u32 %s152, 1
        %s254 = scalar_lea.sflag [#allocation6], %s253
        %s255 = sand.u32 %s152, 1
        %s256 = smul.addr %s255, 8
        %s257 = scalar_lea.vmem [#allocation7], %s256
        %s258 = smul.u32 2, %s25
        %p259 = scmp.lt.s32.totalorder %s24, 1
        %s260 = scalar_select %p259, %s24, 1
        %p261 = scmp.lt.s32.totalorder %s258, 1
        %s262 = scalar_select %p261, %s258, 1
        %s263 = smul.addr %s260, 2
        %s264 = sadd.s32 %s262, %s263
        %s265 = smul.addr %s264, 4
        %s266 = scalar_lea.vmem %s0, %s265
        %s267 = smul.u32 2, %s25
        %p268 = scmp.eq.s32.totalorder %s25, 0
        // Predicated region
        $region45: #{tpu_custom_call.1} parent=39 // pred_check
          %p269 = pneg %p268
        $region46: #{tpu_custom_call.1} parent=39 // pred_check_branch
          %271 = sbr.rel (%p269) target = $region48
        $region47: #{tpu_custom_call.1} parent=39 // pred_region
          %vm272 = vcmask 3072
          %273 = vst.msk [vmem:[#allocation2] sm:$0xf] %vm272, 0.0
          %274 = vst.msk [vmem:[#allocation3] sm:$0xf] %vm272, 0.0
        $region48: #{tpu_custom_call.1} parent=39 // pred_fallthru
          _
        %v275 = vld [vmem:[%s266] sm:$0xff]
        %v276 = vld [vmem:[#allocation4] sm:$0xf]
        %v277 = vld [vmem:[%s2] sm:$0xf]
        %279 = vset.pattern.permute.xlu0 0
        %280 = vperm.xlu0 %279, %v277
        %v281 = vpop.permute.xlu0 %280
        %284 = vst [vmem:[#allocation1] ss:$2 sm:$0xff] %v275
        %v285 = vld.sshfl [vmem:[#allocation1] sm:$0xff pattern:$0x75316420]
        %v286 = vld.sshfl [vmem:[#allocation1 + $0x8] sm:$0xff pattern:$0x75316420]
        %vm287 = vcmask 31744
        %v289 = vsel %vm287, %v276, 0
        %vm291 = vcmask 1043456
        %v292 = vsel %vm291, %v285, 0
        %v294 = vsel %vm291, %v286, 0
        %296 = vmatpush.msra.mxu0 0.0
        %297 = vmatpush.msra.mxu0 0.0
        %298 = vmatpush.msra.mxu0 0.0
        %299 = vmatpush.msra.mxu0 0.0
        %300 = vmatpush.msra.mxu0 0.0
        %301 = vmatpush.msra.mxu0 0.0
        %302 = vmatpush.msra.mxu0 0.0
        %303 = vmatpush.msra.mxu0 0.0
        %304 = vmatpush.msra.mxu0 0.0
        %305 = vmatpush.msra.mxu0 0.0
        %306 = vmatpush.msra.mxu0 0.0
        %307 = vmatpush.msra.mxu0 0.0
        %308 = vmatpush.msra.mxu0 0.0
        %309 = vmatpush.msra.mxu0 0.0
        %310 = vmatpush.msra.mxu0 0.0
        %311 = vmatpush.msra.mxu0 %v292
        %312 = vmatmul.f32.gmra.mxu0 %v289
        %v313 = vpop.f32.mrf.mxu0
        %v314 = vadd.f32 %v281, %v313
        %315 = vdwg.mxu0
        %316 = vmatpush.msra.mxu0 0.0
        %317 = vmatpush.msra.mxu0 0.0
        %318 = vmatpush.msra.mxu0 0.0
        %319 = vmatpush.msra.mxu0 0.0
        %320 = vmatpush.msra.mxu0 0.0
        %321 = vmatpush.msra.mxu0 0.0
        %322 = vmatpush.msra.mxu0 0.0
        %323 = vmatpush.msra.mxu0 0.0
        %324 = vmatpush.msra.mxu0 0.0
        %325 = vmatpush.msra.mxu0 0.0
        %326 = vmatpush.msra.mxu0 0.0
        %327 = vmatpush.msra.mxu0 0.0
        %328 = vmatpush.msra.mxu0 0.0
        %329 = vmatpush.msra.mxu0 0.0
        %330 = vmatpush.msra.mxu0 0.0
        %331 = vmatpush.msra.mxu0 %v294
        %332 = vmatmul.f32.gmra.mxu0 %v289
        %v333 = vpop.f32.mrf.mxu0
        %v334 = vadd.f32 %v281, %v333
        %335 = vdwg.mxu0
        %s336 = scalar_lea.vmem [#allocation4], 4
        %v337 = vld [vmem:[%s336] sm:$0xf]
        %s338 = scalar_lea.vmem %s2, 4
        %v339 = vld [vmem:[%s338] sm:$0xf]
        %341 = vset.pattern.permute.xlu0 0
        %342 = vperm.xlu0 %341, %v339
        %v343 = vpop.permute.xlu0 %342
        %345 = vst [vmem:[#allocation1] ss:$2 sm:$0xff] %v275
        %v346 = vld.sshfl [vmem:[#allocation1] sm:$0xff pattern:$0x75316420]
        %v347 = vld.sshfl [vmem:[#allocation1 + $0x8] sm:$0xff pattern:$0x75316420]
        %v349 = vsel %vm287, %v337, 0
        %v351 = vsel %vm291, %v346, 0
        %v353 = vsel %vm291, %v347, 0
        %355 = vmatpush.msra.mxu0 0.0
        %356 = vmatpush.msra.mxu0 0.0
        %357 = vmatpush.msra.mxu0 0.0
        %358 = vmatpush.msra.mxu0 0.0
        %359 = vmatpush.msra.mxu0 0.0
        %360 = vmatpush.msra.mxu0 0.0
        %361 = vmatpush.msra.mxu0 0.0
        %362 = vmatpush.msra.mxu0 0.0
        %363 = vmatpush.msra.mxu0 0.0
        %364 = vmatpush.msra.mxu0 0.0
        %365 = vmatpush.msra.mxu0 0.0
        %366 = vmatpush.msra.mxu0 0.0
        %367 = vmatpush.msra.mxu0 0.0
        %368 = vmatpush.msra.mxu0 0.0
        %369 = vmatpush.msra.mxu0 0.0
        %370 = vmatpush.msra.mxu0 %v351
        %371 = vmatmul.f32.gmra.mxu0 %v349
        %v372 = vpop.f32.mrf.mxu0
        %v373 = vadd.f32 %v343, %v372
        %374 = vdwg.mxu0
        %375 = vmatpush.msra.mxu0 0.0
        %376 = vmatpush.msra.mxu0 0.0
        %377 = vmatpush.msra.mxu0 0.0
        %378 = vmatpush.msra.mxu0 0.0
        %379 = vmatpush.msra.mxu0 0.0
        %380 = vmatpush.msra.mxu0 0.0
        %381 = vmatpush.msra.mxu0 0.0
        %382 = vmatpush.msra.mxu0 0.0
        %383 = vmatpush.msra.mxu0 0.0
        %384 = vmatpush.msra.mxu0 0.0
        %385 = vmatpush.msra.mxu0 0.0
        %386 = vmatpush.msra.mxu0 0.0
        %387 = vmatpush.msra.mxu0 0.0
        %388 = vmatpush.msra.mxu0 0.0
        %389 = vmatpush.msra.mxu0 0.0
        %390 = vmatpush.msra.mxu0 %v353
        %391 = vmatmul.f32.gmra.mxu0 %v349
        %v392 = vpop.f32.mrf.mxu0
        %v393 = vadd.f32 %v343, %v392
        %394 = vdwg.mxu0
        %v395 = vmax.f32 %v314, %v373
        %v396 = vmax.f32 %v334, %v393
        %s397 = scalar_lea.vmem [#allocation4], 8
        %v398 = vld [vmem:[%s397] sm:$0xf]
        %s399 = scalar_lea.vmem %s2, 8
        %v400 = vld [vmem:[%s399] sm:$0xf]
        %402 = vset.pattern.permute.xlu0 0
        %403 = vperm.xlu0 %402, %v400
        %v404 = vpop.permute.xlu0 %403
        %406 = vst [vmem:[#allocation1] ss:$2 sm:$0xff] %v275
        %v407 = vld.sshfl [vmem:[#allocation1] sm:$0xff pattern:$0x75316420]
        %v408 = vld.sshfl [vmem:[#allocation1 + $0x8] sm:$0xff pattern:$0x75316420]
        %v410 = vsel %vm287, %v398, 0
        %v412 = vsel %vm291, %v407, 0
        %v414 = vsel %vm291, %v408, 0
        %416 = vmatpush.msra.mxu0 0.0
        %417 = vmatpush.msra.mxu0 0.0
        %418 = vmatpush.msra.mxu0 0.0
        %419 = vmatpush.msra.mxu0 0.0
        %420 = vmatpush.msra.mxu0 0.0
        %421 = vmatpush.msra.mxu0 0.0
        %422 = vmatpush.msra.mxu0 0.0
        %423 = vmatpush.msra.mxu0 0.0
        %424 = vmatpush.msra.mxu0 0.0
        %425 = vmatpush.msra.mxu0 0.0
        %426 = vmatpush.msra.mxu0 0.0
        %427 = vmatpush.msra.mxu0 0.0
        %428 = vmatpush.msra.mxu0 0.0
        %429 = vmatpush.msra.mxu0 0.0
        %430 = vmatpush.msra.mxu0 0.0
        %431 = vmatpush.msra.mxu0 %v412
        %432 = vmatmul.f32.gmra.mxu0 %v410
        %v433 = vpop.f32.mrf.mxu0
        %v434 = vadd.f32 %v404, %v433
        %435 = vdwg.mxu0
        %436 = vmatpush.msra.mxu0 0.0
        %437 = vmatpush.msra.mxu0 0.0
        %438 = vmatpush.msra.mxu0 0.0
        %439 = vmatpush.msra.mxu0 0.0
        %440 = vmatpush.msra.mxu0 0.0
        %441 = vmatpush.msra.mxu0 0.0
        %442 = vmatpush.msra.mxu0 0.0
        %443 = vmatpush.msra.mxu0 0.0
        %444 = vmatpush.msra.mxu0 0.0
        %445 = vmatpush.msra.mxu0 0.0
        %446 = vmatpush.msra.mxu0 0.0
        %447 = vmatpush.msra.mxu0 0.0
        %448 = vmatpush.msra.mxu0 0.0
        %449 = vmatpush.msra.mxu0 0.0
        %450 = vmatpush.msra.mxu0 0.0
        %451 = vmatpush.msra.mxu0 %v414
        %452 = vmatmul.f32.gmra.mxu0 %v410
        %v453 = vpop.f32.mrf.mxu0
        %v454 = vadd.f32 %v404, %v453
        %455 = vdwg.mxu0
        %v456 = vmax.f32 %v395, %v434
        %v457 = vmax.f32 %v396, %v454
        %v458 = vld [vmem:[#allocation2] sm:$0xf]
        %v459 = vsel %vm291, %v456, 0.0
        %v460 = vsel %vm291, %v457, 0.0
        %v461 = vadd.f32 %v459, %v460
        %462 = vadd.xlane.f32.xlu0 %v461
        %v463 = vpop.xlane.xlu0 %462
        %v464 = vadd.f32 %v458, %v463
        %vm465 = vcmask 3072
        %466 = vst.msk [vmem:[#allocation2] sm:$0xf] %vm465, %v464
        %v467 = vld [vmem:[#allocation3] sm:$0xf]
        %v468 = vmul.f32 %v456, %v456
        %v469 = vmul.f32 %v457, %v457
        %v470 = vsel %vm291, %v468, 0.0
        %v471 = vsel %vm291, %v469, 0.0
        %v472 = vadd.f32 %v470, %v471
        %473 = vadd.xlane.f32.xlu0 %v472
        %v474 = vpop.xlane.xlu0 %473
        %v475 = vadd.f32 %v467, %v474
        %476 = vst.msk [vmem:[#allocation3] sm:$0xf] %vm465, %v475
        %s477 = smul.u32 %s25, 256
        %v480 = vrot.slane %v457, 4
        %v481 = vsel %vm291, %v456, %v480
        %s483 = sshra.s32 %s477, 7
        %s484 = sand.u32 %s477, 127
        %s485 = smul.addr %s483, 4
        %s486 = scalar_lea.vmem %s257, %s485 [#allocation7]
        %487 = vst [vmem:[%s486] sm:$0xff] %v481
        // Predicated region
        $region49: #{tpu_custom_call.1} parent=39 // pred_check
          %p488 = pneg %p268
        $region50: #{tpu_custom_call.1} parent=39 // pred_check_branch
          %490 = sbr.rel (%p488) target = $region52
        $region51: #{tpu_custom_call.1} parent=39 // pred_region
          %v491 = vld [vmem:[#allocation2] sm:$0xf]
          %v492 = vmul.f32 %v491, 0.00390625
          %v493 = vld [vmem:[#allocation3] sm:$0xf]
          %v494 = vmul.f32 %v493, 0.00390625
          %v495 = vmul.f32 %v492, %v492
          %v496 = vsub.f32 %v494, %v495
          %v497 = vadd.f32 %v496, 1e-05
          %v498 = vrsqrt.pop %v497
          %v499 = vmul.f32 %v498, %v497
          %v500 = vmul.f32 %v499, %v498
          %v501 = vmul.f32 0.5, %v500
          %v502 = vsub.f32 1.5, %v501
          %v503 = vmul.f32 %v498, %v502
          %vm504 = vweird.f32 %v497
          %vm505 = vweird.f32 %v498
          %vm506 = vmor %vm504, %vm505
          %v507 = vsel %vm506, %v498, %v503
          %v508 = vld [vmem:[%s3] sm:$0xf]
          %v509 = vmul.f32 %v508, %v507
          %v510 = vld [vmem:[%s4] sm:$0xf]
          %v511 = vmul.f32 %v492, %v509
          %v512 = vsub.f32 %v510, %v511
          %v513 = vld [vmem:[%s257] sm:$0xff]
          %515 = vset.pattern.permute.xlu0 0
          %516 = vperm.xlu0 %515, %v509
          %v517 = vpop.permute.xlu0 %516
          %v519 = vunpack.c.l.s4 839922192
          %v520 = vunpack.c.0.s8 %v519
          %v521 = vperm.slane %v517, %v520
          %v523 = vmul.f32 %v513, %v521
          %525 = vset.pattern.permute.xlu0 0
          %526 = vperm.xlu0 %525, %v512
          %v527 = vpop.permute.xlu0 %526
          %v529 = vunpack.c.l.s4 839922192
          %v530 = vunpack.c.0.s8 %v529
          %v531 = vperm.slane %v527, %v530
          %v533 = vadd.f32 %v523, %v531
          %534 = vst [vmem:[%s257] sm:$0xff] %v533
        $region52: #{tpu_custom_call.1} parent=39 // pred_fallthru
          _
        %s535 = sand.u32 %s152, 1
        %s536 = scalar_lea.sflag [#allocation6], %s535
        %s537 = sand.u32 %s152, 1
        %s538 = smul.addr %s537, 8
        %s539 = scalar_lea.vmem [#allocation7], %s538
        // Predicated region
        $region53: #{tpu_custom_call.1} parent=39 // pred_check
          %p540 = pneg %p162
        $region54: #{tpu_custom_call.1} parent=39 // pred_check_branch
          %542 = sbr.rel (%p540) target = $region56
        $region55: #{tpu_custom_call.1} parent=39 // pred_region
          %544 = vsyncadd %s536, 0
          %s545 = smul.addr %s24, 2
          %s546 = smul.addr %s545, 4
          %s547 = scalar_lea.hbm %s5, %s546
          %s549 = sshll.u32 %s539, 4
          %s550 = int_to_ptr.vmem [resolvable:$true] %s549
          %s551 = sshll.u32 %s547, 4
          %s552 = int_to_ptr.hbm [resolvable:$true] %s551
          %554 = dma.vmem_to_hbm [thread:$0]  %s550, 128, %s552, %s536
        $region56: #{tpu_custom_call.1} parent=39 // pred_fallthru
          _
      $region40: #{tpu_custom_call.1} parent=5 // pred_fallthru
        _
      %p555 = scmp.le.s32.totalorder 2, %s15
      // Predicated region
      $region57: #{tpu_custom_call.1} parent=5 // pred_check
        %p556 = pneg %p555
      $region58: #{tpu_custom_call.1} parent=5 // pred_check_branch
        %558 = sbr.rel (%p556) target = $region60
      $region59: #{tpu_custom_call.1} parent=5 // pred_region
        %s559 = ssub.s32 %s15, 2
        // Predicated region
        $region61: #{tpu_custom_call.1} parent=59 // pred_check
          %p560 = pneg %p168
        $region62: #{tpu_custom_call.1} parent=59 // pred_check_branch
          %562 = sbr.rel (%p560) target = $region64
        $region63: #{tpu_custom_call.1} parent=59 // pred_region
          %s563 = sand.u32 %s153, 1
          %s564 = scalar_lea.sflag [#allocation6], %s563
          %s565 = sand.u32 %s153, 1
          %s566 = smul.addr %s565, 8
          %s567 = scalar_lea.vmem [#allocation7], %s566
          %569 = dma.done %s564, 128
        $region64: #{tpu_custom_call.1} parent=59 // pred_fallthru
          _
      $region60: #{tpu_custom_call.1} parent=5 // pred_fallthru
        _
    $region6: #{tpu_custom_call.1} parent=1 // loop_footer
      %s19 = sadd.s32 1, %s15
    $region7: #{tpu_custom_call.1} parent=1 // loop_footer_branch
      %14 = sbr.rel target = $region3
    $region8: #{tpu_custom_call.1} parent=1 // loop_exit
      _
    %570 = vsyncpa [#allocation5], 1
    %s571 = scalar_lea.sflag [#allocation5], 1
    %572 = vsyncpa %s571, 1
    %573 = vsyncpa [#allocation6], 1
    %s574 = scalar_lea.sflag [#allocation6], 1
    %575 = vsyncpa %s574, 1

</llo_original>
